<compile_context>
chip_gen: v7x
topology: tpu7x:2x2x1
jax: 0.10.0
libtpu: 0.0.40
codegen_flags: <defaults>
</compile_context>

<pallas_src>
import functools

import jax
import jax.numpy as jnp
from jax.experimental import pallas as pl
from jax.experimental.pallas import tpu as pltpu


def _update_u_kernel(batch_ref, u_ref, v_ref, o_ref, acc_ref):
    # batch_ref: [1, tN] int32 (VMEM), u_ref: [Bp, tD], v_ref: [tN, tD],
    # o_ref: [Bp, tD], acc_ref: [Bp, tD] f32 scratch (resident across k).
    k = pl.program_id(1)

    @pl.when(k == 0)
    def _():
        acc_ref[...] = jnp.zeros_like(acc_ref)

    Bp = u_ref.shape[0]
    tN = v_ref.shape[0]

    batch = batch_ref[...]                                        # (1, tN) int32
    row_ids = jax.lax.broadcasted_iota(jnp.int32, (Bp, tN), 0)    # (Bp, tN)
    onehot = (row_ids == batch).astype(v_ref.dtype)               # (Bp, tN) 0/1

    # Segment-sum for this N tile on the MXU; full precision so f32 v is exact.
    acc_ref[...] += jnp.dot(
        onehot, v_ref[...],
        preferred_element_type=jnp.float32,
        precision=jax.lax.Precision.HIGHEST,
    )

    @pl.when(k == pl.num_programs(1) - 1)
    def _():
        o_ref[...] = (
            acc_ref[...] + u_ref[...].astype(jnp.float32)
        ).astype(o_ref.dtype)


def _round_up(x, m):
    return ((x + m - 1) // m) * m


@functools.partial(jax.jit, static_argnames=("tn_cap", "td_cap"))
def update_u(u, v, batch, *, tn_cap=2048, td_cap=512):
    """u: [B, D] float, v: [N, D] float, batch: [N] int -> [B, D] (u + scatter_sum(v, batch))."""
    B, D = u.shape
    N = v.shape[0]
    out_dtype = u.dtype

    # Padded / tiled geometry: lane dim multiples of 128, sublane multiples of 8.
    B_pad = _round_up(B, 8)
    tD = min(td_cap, _round_up(D, 128))
    D_pad = _round_up(D, tD)
    tN = min(tn_cap, _round_up(N, 128))
    N_pad = _round_up(N, tN)

    # Pad inputs. batch padded with -1 so padded v rows never match any graph id.
    u_p = jnp.zeros((B_pad, D_pad), out_dtype).at[:B, :D].set(u)
    v_p = jnp.zeros((N_pad, D_pad), v.dtype).at[:N, :D].set(v)
    batch_p = (
        jnp.full((1, N_pad), -1, dtype=jnp.int32)
        .at[0, :N]
        .set(batch.astype(jnp.int32))
    )

    grid = (D_pad // tD, N_pad // tN)  # (parallel D tiles, reduction N tiles)

    out_p = pl.pallas_call(
        _update_u_kernel,
        out_shape=jax.ShapeDtypeStruct((B_pad, D_pad), out_dtype),
        grid_spec=pltpu.PrefetchScalarGridSpec(
            num_scalar_prefetch=0,
            grid=grid,
            in_specs=[
                pl.BlockSpec((1, tN), lambda j, k: (0, k)),        # batch row (VMEM)
                pl.BlockSpec((B_pad, tD), lambda j, k: (0, j)),    # u tile
                pl.BlockSpec((tN, tD), lambda j, k: (k, j)),       # v tile (streamed)
            ],
            out_specs=pl.BlockSpec((B_pad, tD), lambda j, k: (0, j)),
            scratch_shapes=[pltpu.VMEM((B_pad, tD), jnp.float32)],
        ),
        input_output_aliases={1: 0},  # reuse padded-u HBM buffer for the output
        compiler_params=pltpu.CompilerParams(
            dimension_semantics=("parallel", "arbitrary"),
            vmem_limit_bytes=32 * 1024 * 1024,
        ),
    )(batch_p, u_p, v_p)

    return out_p[:B, :D]


def _reference(u, v, batch):
    return u + jax.ops.segment_sum(v, batch, num_segments=u.shape[0])


if __name__ == "__main__":
    key = jax.random.PRNGKey(0)

    # Small case consistent with the module: 2 graphs, 8 nodes, hidden=32.
    k_u, k_v, k_b, key = jax.random.split(key, 4)
    B, N, D = 2, 8, 32
    u = jax.random.normal(k_u, (B, D), dtype=jnp.float32)
    v = jax.random.normal(k_v, (N, D), dtype=jnp.float32)
    batch = jax.random.randint(k_b, (N,), 0, B, dtype=jnp.int32)

    out = jax.block_until_ready(update_u(u, v, batch))
    ref = _reference(u, v, batch)
    assert jnp.allclose(out, ref, atol=1e-5, rtol=1e-5), "mismatch vs reference (small)"

    # Second case exercising the multi-tile (D parallel x N reduction) grid path
    # by shrinking the tile caps; shapes stay small.
    k_u2, k_v2, k_b2, key = jax.random.split(key, 4)
    B2, N2, D2 = 3, 300, 200
    u2 = jax.random.normal(k_u2, (B2, D2), dtype=jnp.float32)
    v2 = jax.random.normal(k_v2, (N2, D2), dtype=jnp.float32)
    batch2 = jax.random.randint(k_b2, (N2,), 0, B2, dtype=jnp.int32)

    out2 = jax.block_until_ready(update_u(u2, v2, batch2, tn_cap=128, td_cap=128))
    ref2 = _reference(u2, v2, batch2)
    assert jnp.allclose(out2, ref2, atol=1e-4, rtol=1e-4), "mismatch vs reference (tiled)"

    print("KERNEL_OK")
</pallas_src>

<mosaic_0001>
module attributes {stable_mosaic.version = 11 : i64} {
  func.func @_update_u_kernel(%arg0: i32, %arg1: i32, %arg2: memref<1x128xi32, #tpu.memory_space<vmem>>, %arg3: memref<8x128xf32, #tpu.memory_space<vmem>>, %arg4: memref<128x128xf32, #tpu.memory_space<vmem>>, %arg5: memref<8x128xf32, #tpu.memory_space<vmem>>, %arg6: memref<8x128xf32, #tpu.memory_space<vmem>>) attributes {dimension_semantics = [#tpu.dimension_semantics<parallel>, #tpu.dimension_semantics<arbitrary>], iteration_bounds = array<i64: 1, 1>, scalar_prefetch = 0 : i64, scratch_operands = 1 : i64, tpu.core_type = #tpu.core_type<tc>, window_params = [{transform_indices = @transform_0, window_bounds = array<i64: 1, 128>}, {transform_indices = @transform_1, window_bounds = array<i64: 8, 128>}, {transform_indices = @transform_2, window_bounds = array<i64: 128, 128>}, {transform_indices = @transform_3, window_bounds = array<i64: 8, 128>}]} {
    %c0_i32 = arith.constant 0 : i32
    %0 = arith.cmpi eq, %arg1, %c0_i32 : i32
    %1 = arith.extui %0 : i1 to i32
    %c0_i32_0 = arith.constant 0 : i32
    %2 = arith.cmpi ne, %1, %c0_i32_0 : i32
    scf.if %2 {
      %cst_10 = arith.constant 0.000000e+00 : f32
      %17 = vector.broadcast %cst_10 : f32 to vector<8x128xf32>
      %c0_11 = arith.constant 0 : index
      %c0_12 = arith.constant 0 : index
      %18 = vector.load %arg6[%c0_11, %c0_12] : memref<8x128xf32, #tpu.memory_space<vmem>>, vector<8x128xf32>
      tpu.vector_store %arg6[%c0_11, %c0_12], %17 {strides = array<i32>} : memref<8x128xf32, #tpu.memory_space<vmem>>, vector<8x128xf32>,
    } else {
    }
    %c0 = arith.constant 0 : index
    %c0_1 = arith.constant 0 : index
    %3 = vector.load %arg2[%c0, %c0_1] : memref<1x128xi32, #tpu.memory_space<vmem>>, vector<1x128xi32>
    %4 = tpu.iota {dimensions = array<i32: 0>} : vector<8x128xi32>
    %5 = vector.broadcast %3 : vector<1x128xi32> to vector<8x128xi32>
    %6 = arith.cmpi eq, %4, %5 : vector<8x128xi32>
    %7 = arith.extui %6 : vector<8x128xi1> to vector<8x128xi32>
    %8 = arith.sitofp %7 : vector<8x128xi32> to vector<8x128xf32>
    %c0_2 = arith.constant 0 : index
    %c0_3 = arith.constant 0 : index
    %9 = vector.load %arg6[%c0_2, %c0_3] : memref<8x128xf32, #tpu.memory_space<vmem>>, vector<8x128xf32>
    %c0_4 = arith.constant 0 : index
    %c0_5 = arith.constant 0 : index
    %10 = vector.load %arg4[%c0_4, %c0_5] : memref<128x128xf32, #tpu.memory_space<vmem>>, vector<128x128xf32>
    %cst = arith.constant dense<0.000000e+00> : vector<8x128xf32>
    %11 = tpu.matmul %8, %10, %cst {dimension_numbers = #tpu.dot_dimension_numbers<[1], [0], [0], [1], [0, 0, 1, 1], [], []>, precision = #tpu.contract_precision<fp32>} : vector<8x128xf32>, vector<128x128xf32>, vector<8x128xf32> -> vector<8x128xf32>
    %12 = arith.addf %9, %11 : vector<8x128xf32>
    %c0_6 = arith.constant 0 : index
    %c0_7 = arith.constant 0 : index
    %13 = vector.load %arg6[%c0_6, %c0_7] : memref<8x128xf32, #tpu.memory_space<vmem>>, vector<8x128xf32>
    tpu.vector_store %arg6[%c0_6, %c0_7], %12 {strides = array<i32>} : memref<8x128xf32, #tpu.memory_space<vmem>>, vector<8x128xf32>,
    %c0_i32_8 = arith.constant 0 : i32
    %14 = arith.cmpi eq, %arg1, %c0_i32_8 : i32
    %15 = arith.extui %14 : i1 to i32
    %c0_i32_9 = arith.constant 0 : i32
    %16 = arith.cmpi ne, %15, %c0_i32_9 : i32
    scf.if %16 {
      %c0_10 = arith.constant 0 : index
      %c0_11 = arith.constant 0 : index
      %17 = vector.load %arg6[%c0_10, %c0_11] : memref<8x128xf32, #tpu.memory_space<vmem>>, vector<8x128xf32>
      %c0_12 = arith.constant 0 : index
      %c0_13 = arith.constant 0 : index
      %18 = vector.load %arg3[%c0_12, %c0_13] : memref<8x128xf32, #tpu.memory_space<vmem>>, vector<8x128xf32>
      %19 = arith.addf %17, %18 : vector<8x128xf32>
      %c0_14 = arith.constant 0 : index
      %c0_15 = arith.constant 0 : index
      %20 = vector.load %arg5[%c0_14, %c0_15] : memref<8x128xf32, #tpu.memory_space<vmem>>, vector<8x128xf32>
      tpu.vector_store %arg5[%c0_14, %c0_15], %19 {strides = array<i32>} : memref<8x128xf32, #tpu.memory_space<vmem>>, vector<8x128xf32>,
    } else {
    }
    return
  }
  func.func @transform_0(%arg0: i32, %arg1: i32) -> (i32, i32) {
    %c0_i32 = arith.constant 0 : i32
    %c0_i32_0 = arith.constant 0 : i32
    return %c0_i32, %arg1 : i32, i32
  }
  func.func @transform_1(%arg0: i32, %arg1: i32) -> (i32, i32) {
    %c0_i32 = arith.constant 0 : i32
    %c0_i32_0 = arith.constant 0 : i32
    return %c0_i32, %arg0 : i32, i32
  }
  func.func @transform_2(%arg0: i32, %arg1: i32) -> (i32, i32) {
    %c0_i32 = arith.constant 0 : i32
    return %arg1, %arg0 : i32, i32
  }
  func.func @transform_3(%arg0: i32, %arg1: i32) -> (i32, i32) {
    %c0_i32 = arith.constant 0 : i32
    %c0_i32_0 = arith.constant 0 : i32
    return %c0_i32, %arg0 : i32, i32
  }
}

</mosaic_0001>

<llo_original>
// kernel: update_u.1
$region0: #{update_u.1}
  #allocation0 [shape = 'u32[]', space=smem, size = 0x4, offset = 0x4, fixed_abs, tag = 'smem constant byte address 0x4 - core index']
  #allocation1 [shape = 'u32[144,128]{1,0:T(1,128)}', space=vmem, size = 0x12000, scoped, tag = 'internal scratch']
  #allocation2 [shape = 'f32[8,128]{1,0:T(8,128)}', space=vmem, size = 0x1000, scoped, tag = 'scratch operand']
  %s0 = inlined_call_operand.vmem [shape: s32[1,128], index: 0, kind: input, shape index: {}]
  %s1 = inlined_call_operand.vmem [shape: f32[8,128], index: 1, kind: input, shape index: {}, may-alias: {1,3}]
  %s2 = inlined_call_operand.vmem [shape: f32[128,128], index: 2, kind: input, shape index: {}]
  %s3 = inlined_call_operand.vmem [shape: f32[8,128], index: 3, kind: output, shape index: {}, may-alias: {1,3}]
  %s4 = sld [smem:[#allocation0]]
  $region30: #{update_u.1} parent=0
    _
  %s6 = ssub.s32 1, %s4
  %s7 = scalar_select 0, %s6, %s4
  // Predicated region
  $region2: #{update_u.1} parent=0 // pred_check
    _
  $region3: #{update_u.1} parent=0 // pred_check_branch
    %9 = sbr.rel (0) target = $region5
  $region4: #{update_u.1} parent=0 // pred_region
    _
  $region5: #{update_u.1} parent=0 // pred_fallthru
    _
  // Predicated region
  $region6: #{update_u.1} parent=0 // pred_check
    _
  $region7: #{update_u.1} parent=0 // pred_check_branch
    %11 = sbr.rel (0) target = $region9
  $region8: #{update_u.1} parent=0 // pred_region
    _
  $region9: #{update_u.1} parent=0 // pred_fallthru
    _
  // Predicated region
  $region10: #{update_u.1} parent=0 // pred_check
    _
  $region11: #{update_u.1} parent=0 // pred_check_branch
    %13 = sbr.rel (0) target = $region13
  $region12: #{update_u.1} parent=0 // pred_region
    _
  $region13: #{update_u.1} parent=0 // pred_fallthru
    _
  %p14 = scmp.eq.s32.totalorder 0, 0
  // Predicated region
  $region14: #{update_u.1} parent=0 // pred_check
    %p15 = pneg %p14
  $region15: #{update_u.1} parent=0 // pred_check_branch
    %17 = sbr.rel (%p15) target = $region17
  $region16: #{update_u.1} parent=0 // pred_region
    %18 = vst [vmem:[#allocation2] sm:$0xff] 0.0
  $region17: #{update_u.1} parent=0 // pred_fallthru
    _
  %v19 = vld [vmem:[%s0] sm:$0x1]
  %v20 = vlaneseq
  %v21 = vshrl.u32 %v20, 7
  %v22 = vlaneseq
  %v23 = vshrl.u32 %v22, 7
  %v24 = vsub.s32 0, %v23
  %v25 = vrot.slane %v19, %v24
  %vm26 = vcmp.eq.s32.totalorder %v21, %v25
  %v27 = vsel %vm26, 1, 0
  %v28 = vcvt.s32.f32 %v27
  %v29 = vld [vmem:[#allocation2] sm:$0xff]
  %v30 = vld [vmem:[%s2] sm:$0xff]
  %v31 = vld [vmem:[%s2 + $0x8] sm:$0xff]
  %v32 = vld [vmem:[%s2 + $0x10] sm:$0xff]
  %v33 = vld [vmem:[%s2 + $0x18] sm:$0xff]
  %v34 = vld [vmem:[%s2 + $0x20] sm:$0xff]
  %v35 = vld [vmem:[%s2 + $0x28] sm:$0xff]
  %v36 = vld [vmem:[%s2 + $0x30] sm:$0xff]
  %v37 = vld [vmem:[%s2 + $0x38] sm:$0xff]
  %v38 = vld [vmem:[%s2 + $0x40] sm:$0xff]
  %v39 = vld [vmem:[%s2 + $0x48] sm:$0xff]
  %v40 = vld [vmem:[%s2 + $0x50] sm:$0xff]
  %v41 = vld [vmem:[%s2 + $0x58] sm:$0xff]
  %v42 = vld [vmem:[%s2 + $0x60] sm:$0xff]
  %v43 = vld [vmem:[%s2 + $0x68] sm:$0xff]
  %v44 = vld [vmem:[%s2 + $0x70] sm:$0xff]
  %v45 = vld [vmem:[%s2 + $0x78] sm:$0xff]
  %46 = vmatprep.subr.mxu0 0.0
  %v47 = vand.u32 %v30, 4294901760
  %48 = vmatpush1.msra.mxu0 %v47
  %49 = vmatprep.subr.mxu0 0.0
  %v50 = vand.u32 %v31, 4294901760
  %51 = vmatpush1.msra.mxu0 %v50
  %52 = vmatprep.subr.mxu0 0.0
  %v53 = vand.u32 %v32, 4294901760
  %54 = vmatpush1.msra.mxu0 %v53
  %55 = vmatprep.subr.mxu0 0.0
  %v56 = vand.u32 %v33, 4294901760
  %57 = vmatpush1.msra.mxu0 %v56
  %58 = vmatprep.subr.mxu0 0.0
  %v59 = vand.u32 %v34, 4294901760
  %60 = vmatpush1.msra.mxu0 %v59
  %61 = vmatprep.subr.mxu0 0.0
  %v62 = vand.u32 %v35, 4294901760
  %63 = vmatpush1.msra.mxu0 %v62
  %64 = vmatprep.subr.mxu0 0.0
  %v65 = vand.u32 %v36, 4294901760
  %66 = vmatpush1.msra.mxu0 %v65
  %67 = vmatprep.subr.mxu0 0.0
  %v68 = vand.u32 %v37, 4294901760
  %69 = vmatpush1.msra.mxu0 %v68
  %70 = vmatprep.subr.mxu0 0.0
  %v71 = vand.u32 %v38, 4294901760
  %72 = vmatpush1.msra.mxu0 %v71
  %73 = vmatprep.subr.mxu0 0.0
  %v74 = vand.u32 %v39, 4294901760
  %75 = vmatpush1.msra.mxu0 %v74
  %76 = vmatprep.subr.mxu0 0.0
  %v77 = vand.u32 %v40, 4294901760
  %78 = vmatpush1.msra.mxu0 %v77
  %79 = vmatprep.subr.mxu0 0.0
  %v80 = vand.u32 %v41, 4294901760
  %81 = vmatpush1.msra.mxu0 %v80
  %82 = vmatprep.subr.mxu0 0.0
  %v83 = vand.u32 %v42, 4294901760
  %84 = vmatpush1.msra.mxu0 %v83
  %85 = vmatprep.subr.mxu0 0.0
  %v86 = vand.u32 %v43, 4294901760
  %87 = vmatpush1.msra.mxu0 %v86
  %88 = vmatprep.subr.mxu0 0.0
  %v89 = vand.u32 %v44, 4294901760
  %90 = vmatpush1.msra.mxu0 %v89
  %91 = vmatprep.subr.mxu0 0.0
  %v92 = vand.u32 %v45, 4294901760
  %93 = vmatpush1.msra.mxu0 %v92
  %94 = vmatprep.subr.mxu0 0.0
  %95 = vmatpush1.msra.mxu0 0.0
  %96 = vmatprep.subr.mxu0 0.0
  %97 = vmatpush1.msra.mxu0 0.0
  %98 = vmatprep.subr.mxu0 0.0
  %99 = vmatpush1.msra.mxu0 0.0
  %100 = vmatprep.subr.mxu0 0.0
  %101 = vmatpush1.msra.mxu0 0.0
  %102 = vmatprep.subr.mxu0 0.0
  %103 = vmatpush1.msra.mxu0 0.0
  %104 = vmatprep.subr.mxu0 0.0
  %105 = vmatpush1.msra.mxu0 0.0
  %106 = vmatprep.subr.mxu0 0.0
  %107 = vmatpush1.msra.mxu0 0.0
  %108 = vmatprep.subr.mxu0 0.0
  %109 = vmatpush1.msra.mxu0 0.0
  %110 = vmatprep.subr.mxu0 0.0
  %111 = vmatpush1.msra.mxu0 0.0
  %112 = vmatprep.subr.mxu0 0.0
  %113 = vmatpush1.msra.mxu0 0.0
  %114 = vmatprep.subr.mxu0 0.0
  %115 = vmatpush1.msra.mxu0 0.0
  %116 = vmatprep.subr.mxu0 0.0
  %117 = vmatpush1.msra.mxu0 0.0
  %118 = vmatprep.subr.mxu0 0.0
  %119 = vmatpush1.msra.mxu0 0.0
  %120 = vmatprep.subr.mxu0 0.0
  %121 = vmatpush1.msra.mxu0 0.0
  %122 = vmatprep.subr.mxu0 0.0
  %123 = vmatpush1.msra.mxu0 0.0
  %124 = vmatprep.subr.mxu0 0.0
  %125 = vmatpush1.msra.mxu0 0.0
  %126 = vmatprep.mubr.f32.mxu0 0.0
  %v127 = vand.u32 %v28, 4294901760
  %v128 = vsub.f32 %v28, %v127
  %v129 = vand.u32 %v128, 4294901760
  %v130 = vsub.f32 %v128, %v129
  %v131 = vand.u32 %v130, 4294901760
  %132 = vmatmul.mubr.f32.gmra.mrb[0].mxu0 %v131
  %v133 = vpop.f32.mrb[0].mxu0
  %v134 = vadd.f32 0.0, %v133
  %v135 = vpop.f32.mrb[0].mxu0
  %136 = vdwg.mxu0
  %137 = vmatprep.subr.mxu0 0.0
  %v138 = vand.u32 %v30, 4294901760
  %v139 = vsub.f32 %v30, %v138
  %v140 = vand.u32 %v139, 4294901760
  %v141 = vsub.f32 %v139, %v140
  %v142 = vand.u32 %v141, 4294901760
  %143 = vmatpush1.msra.mxu0 %v142
  %144 = vmatprep.subr.mxu0 0.0
  %v145 = vand.u32 %v31, 4294901760
  %v146 = vsub.f32 %v31, %v145
  %v147 = vand.u32 %v146, 4294901760
  %v148 = vsub.f32 %v146, %v147
  %v149 = vand.u32 %v148, 4294901760
  %150 = vmatpush1.msra.mxu0 %v149
  %151 = vmatprep.subr.mxu0 0.0
  %v152 = vand.u32 %v32, 4294901760
  %v153 = vsub.f32 %v32, %v152
  %v154 = vand.u32 %v153, 4294901760
  %v155 = vsub.f32 %v153, %v154
  %v156 = vand.u32 %v155, 4294901760
  %157 = vmatpush1.msra.mxu0 %v156
  %158 = vmatprep.subr.mxu0 0.0
  %v159 = vand.u32 %v33, 4294901760
  %v160 = vsub.f32 %v33, %v159
  %v161 = vand.u32 %v160, 4294901760
  %v162 = vsub.f32 %v160, %v161
  %v163 = vand.u32 %v162, 4294901760
  %164 = vmatpush1.msra.mxu0 %v163
  %165 = vmatprep.subr.mxu0 0.0
  %v166 = vand.u32 %v34, 4294901760
  %v167 = vsub.f32 %v34, %v166
  %v168 = vand.u32 %v167, 4294901760
  %v169 = vsub.f32 %v167, %v168
  %v170 = vand.u32 %v169, 4294901760
  %171 = vmatpush1.msra.mxu0 %v170
  %172 = vmatprep.subr.mxu0 0.0
  %v173 = vand.u32 %v35, 4294901760
  %v174 = vsub.f32 %v35, %v173
  %v175 = vand.u32 %v174, 4294901760
  %v176 = vsub.f32 %v174, %v175
  %v177 = vand.u32 %v176, 4294901760
  %178 = vmatpush1.msra.mxu0 %v177
  %179 = vmatprep.subr.mxu0 0.0
  %v180 = vand.u32 %v36, 4294901760
  %v181 = vsub.f32 %v36, %v180
  %v182 = vand.u32 %v181, 4294901760
  %v183 = vsub.f32 %v181, %v182
  %v184 = vand.u32 %v183, 4294901760
  %185 = vmatpush1.msra.mxu0 %v184
  %186 = vmatprep.subr.mxu0 0.0
  %v187 = vand.u32 %v37, 4294901760
  %v188 = vsub.f32 %v37, %v187
  %v189 = vand.u32 %v188, 4294901760
  %v190 = vsub.f32 %v188, %v189
  %v191 = vand.u32 %v190, 4294901760
  %192 = vmatpush1.msra.mxu0 %v191
  %193 = vmatprep.subr.mxu0 0.0
  %v194 = vand.u32 %v38, 4294901760
  %v195 = vsub.f32 %v38, %v194
  %v196 = vand.u32 %v195, 4294901760
  %v197 = vsub.f32 %v195, %v196
  %v198 = vand.u32 %v197, 4294901760
  %199 = vmatpush1.msra.mxu0 %v198
  %200 = vmatprep.subr.mxu0 0.0
  %v201 = vand.u32 %v39, 4294901760
  %v202 = vsub.f32 %v39, %v201
  %v203 = vand.u32 %v202, 4294901760
  %v204 = vsub.f32 %v202, %v203
  %v205 = vand.u32 %v204, 4294901760
  %206 = vmatpush1.msra.mxu0 %v205
  %207 = vmatprep.subr.mxu0 0.0
  %v208 = vand.u32 %v40, 4294901760
  %v209 = vsub.f32 %v40, %v208
  %v210 = vand.u32 %v209, 4294901760
  %v211 = vsub.f32 %v209, %v210
  %v212 = vand.u32 %v211, 4294901760
  %213 = vmatpush1.msra.mxu0 %v212
  %214 = vmatprep.subr.mxu0 0.0
  %v215 = vand.u32 %v41, 4294901760
  %v216 = vsub.f32 %v41, %v215
  %v217 = vand.u32 %v216, 4294901760
  %v218 = vsub.f32 %v216, %v217
  %v219 = vand.u32 %v218, 4294901760
  %220 = vmatpush1.msra.mxu0 %v219
  %221 = vmatprep.subr.mxu0 0.0
  %v222 = vand.u32 %v42, 4294901760
  %v223 = vsub.f32 %v42, %v222
  %v224 = vand.u32 %v223, 4294901760
  %v225 = vsub.f32 %v223, %v224
  %v226 = vand.u32 %v225, 4294901760
  %227 = vmatpush1.msra.mxu0 %v226
  %228 = vmatprep.subr.mxu0 0.0
  %v229 = vand.u32 %v43, 4294901760
  %v230 = vsub.f32 %v43, %v229
  %v231 = vand.u32 %v230, 4294901760
  %v232 = vsub.f32 %v230, %v231
  %v233 = vand.u32 %v232, 4294901760
  %234 = vmatpush1.msra.mxu0 %v233
  %235 = vmatprep.subr.mxu0 0.0
  %v236 = vand.u32 %v44, 4294901760
  %v237 = vsub.f32 %v44, %v236
  %v238 = vand.u32 %v237, 4294901760
  %v239 = vsub.f32 %v237, %v238
  %v240 = vand.u32 %v239, 4294901760
  %241 = vmatpush1.msra.mxu0 %v240
  %242 = vmatprep.subr.mxu0 0.0
  %v243 = vand.u32 %v45, 4294901760
  %v244 = vsub.f32 %v45, %v243
  %v245 = vand.u32 %v244, 4294901760
  %v246 = vsub.f32 %v244, %v245
  %v247 = vand.u32 %v246, 4294901760
  %248 = vmatpush1.msra.mxu0 %v247
  %249 = vmatprep.subr.mxu0 0.0
  %250 = vmatpush1.msra.mxu0 0.0
  %251 = vmatprep.subr.mxu0 0.0
  %252 = vmatpush1.msra.mxu0 0.0
  %253 = vmatprep.subr.mxu0 0.0
  %254 = vmatpush1.msra.mxu0 0.0
  %255 = vmatprep.subr.mxu0 0.0
  %256 = vmatpush1.msra.mxu0 0.0
  %257 = vmatprep.subr.mxu0 0.0
  %258 = vmatpush1.msra.mxu0 0.0
  %259 = vmatprep.subr.mxu0 0.0
  %260 = vmatpush1.msra.mxu0 0.0
  %261 = vmatprep.subr.mxu0 0.0
  %262 = vmatpush1.msra.mxu0 0.0
  %263 = vmatprep.subr.mxu0 0.0
  %264 = vmatpush1.msra.mxu0 0.0
  %265 = vmatprep.subr.mxu0 0.0
  %266 = vmatpush1.msra.mxu0 0.0
  %267 = vmatprep.subr.mxu0 0.0
  %268 = vmatpush1.msra.mxu0 0.0
  %269 = vmatprep.subr.mxu0 0.0
  %270 = vmatpush1.msra.mxu0 0.0
  %271 = vmatprep.subr.mxu0 0.0
  %272 = vmatpush1.msra.mxu0 0.0
  %273 = vmatprep.subr.mxu0 0.0
  %274 = vmatpush1.msra.mxu0 0.0
  %275 = vmatprep.subr.mxu0 0.0
  %276 = vmatpush1.msra.mxu0 0.0
  %277 = vmatprep.subr.mxu0 0.0
  %278 = vmatpush1.msra.mxu0 0.0
  %279 = vmatprep.subr.mxu0 0.0
  %280 = vmatpush1.msra.mxu0 0.0
  %281 = vmatprep.mubr.f32.mxu0 0.0
  %v282 = vand.u32 %v28, 4294901760
  %283 = vmatmul.mubr.f32.gmra.mrb[0].mxu0 %v282
  %v284 = vpop.f32.mrb[0].mxu0
  %v285 = vadd.f32 %v134, %v284
  %v286 = vpop.f32.mrb[0].mxu0
  %287 = vdwg.mxu0
  %288 = vmatprep.subr.mxu0 0.0
  %v289 = vand.u32 %v30, 4294901760
  %v290 = vsub.f32 %v30, %v289
  %291 = vmatpush1.msra.mxu0 %v290
  %292 = vmatprep.subr.mxu0 0.0
  %v293 = vand.u32 %v31, 4294901760
  %v294 = vsub.f32 %v31, %v293
  %295 = vmatpush1.msra.mxu0 %v294
  %296 = vmatprep.subr.mxu0 0.0
  %v297 = vand.u32 %v32, 4294901760
  %v298 = vsub.f32 %v32, %v297
  %299 = vmatpush1.msra.mxu0 %v298
  %300 = vmatprep.subr.mxu0 0.0
  %v301 = vand.u32 %v33, 4294901760
  %v302 = vsub.f32 %v33, %v301
  %303 = vmatpush1.msra.mxu0 %v302
  %304 = vmatprep.subr.mxu0 0.0
  %v305 = vand.u32 %v34, 4294901760
  %v306 = vsub.f32 %v34, %v305
  %307 = vmatpush1.msra.mxu0 %v306
  %308 = vmatprep.subr.mxu0 0.0
  %v309 = vand.u32 %v35, 4294901760
  %v310 = vsub.f32 %v35, %v309
  %311 = vmatpush1.msra.mxu0 %v310
  %312 = vmatprep.subr.mxu0 0.0
  %v313 = vand.u32 %v36, 4294901760
  %v314 = vsub.f32 %v36, %v313
  %315 = vmatpush1.msra.mxu0 %v314
  %316 = vmatprep.subr.mxu0 0.0
  %v317 = vand.u32 %v37, 4294901760
  %v318 = vsub.f32 %v37, %v317
  %319 = vmatpush1.msra.mxu0 %v318
  %320 = vmatprep.subr.mxu0 0.0
  %v321 = vand.u32 %v38, 4294901760
  %v322 = vsub.f32 %v38, %v321
  %323 = vmatpush1.msra.mxu0 %v322
  %324 = vmatprep.subr.mxu0 0.0
  %v325 = vand.u32 %v39, 4294901760
  %v326 = vsub.f32 %v39, %v325
  %327 = vmatpush1.msra.mxu0 %v326
  %328 = vmatprep.subr.mxu0 0.0
  %v329 = vand.u32 %v40, 4294901760
  %v330 = vsub.f32 %v40, %v329
  %331 = vmatpush1.msra.mxu0 %v330
  %332 = vmatprep.subr.mxu0 0.0
  %v333 = vand.u32 %v41, 4294901760
  %v334 = vsub.f32 %v41, %v333
  %335 = vmatpush1.msra.mxu0 %v334
  %336 = vmatprep.subr.mxu0 0.0
  %v337 = vand.u32 %v42, 4294901760
  %v338 = vsub.f32 %v42, %v337
  %339 = vmatpush1.msra.mxu0 %v338
  %340 = vmatprep.subr.mxu0 0.0
  %v341 = vand.u32 %v43, 4294901760
  %v342 = vsub.f32 %v43, %v341
  %343 = vmatpush1.msra.mxu0 %v342
  %344 = vmatprep.subr.mxu0 0.0
  %v345 = vand.u32 %v44, 4294901760
  %v346 = vsub.f32 %v44, %v345
  %347 = vmatpush1.msra.mxu0 %v346
  %348 = vmatprep.subr.mxu0 0.0
  %v349 = vand.u32 %v45, 4294901760
  %v350 = vsub.f32 %v45, %v349
  %351 = vmatpush1.msra.mxu0 %v350
  %352 = vmatprep.subr.mxu0 0.0
  %353 = vmatpush1.msra.mxu0 0.0
  %354 = vmatprep.subr.mxu0 0.0
  %355 = vmatpush1.msra.mxu0 0.0
  %356 = vmatprep.subr.mxu0 0.0
  %357 = vmatpush1.msra.mxu0 0.0
  %358 = vmatprep.subr.mxu0 0.0
  %359 = vmatpush1.msra.mxu0 0.0
  %360 = vmatprep.subr.mxu0 0.0
  %361 = vmatpush1.msra.mxu0 0.0
  %362 = vmatprep.subr.mxu0 0.0
  %363 = vmatpush1.msra.mxu0 0.0
  %364 = vmatprep.subr.mxu0 0.0
  %365 = vmatpush1.msra.mxu0 0.0
  %366 = vmatprep.subr.mxu0 0.0
  %367 = vmatpush1.msra.mxu0 0.0
  %368 = vmatprep.subr.mxu0 0.0
  %369 = vmatpush1.msra.mxu0 0.0
  %370 = vmatprep.subr.mxu0 0.0
  %371 = vmatpush1.msra.mxu0 0.0
  %372 = vmatprep.subr.mxu0 0.0
  %373 = vmatpush1.msra.mxu0 0.0
  %374 = vmatprep.subr.mxu0 0.0
  %375 = vmatpush1.msra.mxu0 0.0
  %376 = vmatprep.subr.mxu0 0.0
  %377 = vmatpush1.msra.mxu0 0.0
  %378 = vmatprep.subr.mxu0 0.0
  %379 = vmatpush1.msra.mxu0 0.0
  %380 = vmatprep.subr.mxu0 0.0
  %381 = vmatpush1.msra.mxu0 0.0
  %382 = vmatprep.subr.mxu0 0.0
  %383 = vmatpush1.msra.mxu0 0.0
  %384 = vmatprep.mubr.f32.mxu0 0.0
  %v385 = vand.u32 %v28, 4294901760
  %v386 = vsub.f32 %v28, %v385
  %387 = vmatmul.mubr.f32.gmra.mrb[0].mxu0 %v386
  %v388 = vpop.f32.mrb[0].mxu0
  %v389 = vadd.f32 %v285, %v388
  %v390 = vpop.f32.mrb[0].mxu0
  %391 = vdwg.mxu0
  %392 = vmatprep.subr.mxu0 0.0
  %v393 = vand.u32 %v30, 4294901760
  %394 = vmatpush1.msra.mxu0 %v393
  %395 = vmatprep.subr.mxu0 0.0
  %v396 = vand.u32 %v31, 4294901760
  %397 = vmatpush1.msra.mxu0 %v396
  %398 = vmatprep.subr.mxu0 0.0
  %v399 = vand.u32 %v32, 4294901760
  %400 = vmatpush1.msra.mxu0 %v399
  %401 = vmatprep.subr.mxu0 0.0
  %v402 = vand.u32 %v33, 4294901760
  %403 = vmatpush1.msra.mxu0 %v402
  %404 = vmatprep.subr.mxu0 0.0
  %v405 = vand.u32 %v34, 4294901760
  %406 = vmatpush1.msra.mxu0 %v405
  %407 = vmatprep.subr.mxu0 0.0
  %v408 = vand.u32 %v35, 4294901760
  %409 = vmatpush1.msra.mxu0 %v408
  %410 = vmatprep.subr.mxu0 0.0
  %v411 = vand.u32 %v36, 4294901760
  %412 = vmatpush1.msra.mxu0 %v411
  %413 = vmatprep.subr.mxu0 0.0
  %v414 = vand.u32 %v37, 4294901760
  %415 = vmatpush1.msra.mxu0 %v414
  %416 = vmatprep.subr.mxu0 0.0
  %v417 = vand.u32 %v38, 4294901760
  %418 = vmatpush1.msra.mxu0 %v417
  %419 = vmatprep.subr.mxu0 0.0
  %v420 = vand.u32 %v39, 4294901760
  %421 = vmatpush1.msra.mxu0 %v420
  %422 = vmatprep.subr.mxu0 0.0
  %v423 = vand.u32 %v40, 4294901760
  %424 = vmatpush1.msra.mxu0 %v423
  %425 = vmatprep.subr.mxu0 0.0
  %v426 = vand.u32 %v41, 4294901760
  %427 = vmatpush1.msra.mxu0 %v426
  %428 = vmatprep.subr.mxu0 0.0
  %v429 = vand.u32 %v42, 4294901760
  %430 = vmatpush1.msra.mxu0 %v429
  %431 = vmatprep.subr.mxu0 0.0
  %v432 = vand.u32 %v43, 4294901760
  %433 = vmatpush1.msra.mxu0 %v432
  %434 = vmatprep.subr.mxu0 0.0
  %v435 = vand.u32 %v44, 4294901760
  %436 = vmatpush1.msra.mxu0 %v435
  %437 = vmatprep.subr.mxu0 0.0
  %v438 = vand.u32 %v45, 4294901760
  %439 = vmatpush1.msra.mxu0 %v438
  %440 = vmatprep.subr.mxu0 0.0
  %441 = vmatpush1.msra.mxu0 0.0
  %442 = vmatprep.subr.mxu0 0.0
  %443 = vmatpush1.msra.mxu0 0.0
  %444 = vmatprep.subr.mxu0 0.0
  %445 = vmatpush1.msra.mxu0 0.0
  %446 = vmatprep.subr.mxu0 0.0
  %447 = vmatpush1.msra.mxu0 0.0
  %448 = vmatprep.subr.mxu0 0.0
  %449 = vmatpush1.msra.mxu0 0.0
  %450 = vmatprep.subr.mxu0 0.0
  %451 = vmatpush1.msra.mxu0 0.0
  %452 = vmatprep.subr.mxu0 0.0
  %453 = vmatpush1.msra.mxu0 0.0
  %454 = vmatprep.subr.mxu0 0.0
  %455 = vmatpush1.msra.mxu0 0.0
  %456 = vmatprep.subr.mxu0 0.0
  %457 = vmatpush1.msra.mxu0 0.0
  %458 = vmatprep.subr.mxu0 0.0
  %459 = vmatpush1.msra.mxu0 0.0
  %460 = vmatprep.subr.mxu0 0.0
  %461 = vmatpush1.msra.mxu0 0.0
  %462 = vmatprep.subr.mxu0 0.0
  %463 = vmatpush1.msra.mxu0 0.0
  %464 = vmatprep.subr.mxu0 0.0
  %465 = vmatpush1.msra.mxu0 0.0
  %466 = vmatprep.subr.mxu0 0.0
  %467 = vmatpush1.msra.mxu0 0.0
  %468 = vmatprep.subr.mxu0 0.0
  %469 = vmatpush1.msra.mxu0 0.0
  %470 = vmatprep.subr.mxu0 0.0
  %471 = vmatpush1.msra.mxu0 0.0
  %472 = vmatprep.mubr.f32.mxu0 0.0
  %v473 = vand.u32 %v28, 4294901760
  %v474 = vsub.f32 %v28, %v473
  %v475 = vand.u32 %v474, 4294901760
  %476 = vmatmul.mubr.f32.gmra.mrb[0].mxu0 %v475
  %v477 = vpop.f32.mrb[0].mxu0
  %v478 = vadd.f32 %v389, %v477
  %v479 = vpop.f32.mrb[0].mxu0
  %480 = vdwg.mxu0
  %481 = vmatprep.subr.mxu0 0.0
  %v482 = vand.u32 %v30, 4294901760
  %v483 = vsub.f32 %v30, %v482
  %v484 = vand.u32 %v483, 4294901760
  %485 = vmatpush1.msra.mxu0 %v484
  %486 = vmatprep.subr.mxu0 0.0
  %v487 = vand.u32 %v31, 4294901760
  %v488 = vsub.f32 %v31, %v487
  %v489 = vand.u32 %v488, 4294901760
  %490 = vmatpush1.msra.mxu0 %v489
  %491 = vmatprep.subr.mxu0 0.0
  %v492 = vand.u32 %v32, 4294901760
  %v493 = vsub.f32 %v32, %v492
  %v494 = vand.u32 %v493, 4294901760
  %495 = vmatpush1.msra.mxu0 %v494
  %496 = vmatprep.subr.mxu0 0.0
  %v497 = vand.u32 %v33, 4294901760
  %v498 = vsub.f32 %v33, %v497
  %v499 = vand.u32 %v498, 4294901760
  %500 = vmatpush1.msra.mxu0 %v499
  %501 = vmatprep.subr.mxu0 0.0
  %v502 = vand.u32 %v34, 4294901760
  %v503 = vsub.f32 %v34, %v502
  %v504 = vand.u32 %v503, 4294901760
  %505 = vmatpush1.msra.mxu0 %v504
  %506 = vmatprep.subr.mxu0 0.0
  %v507 = vand.u32 %v35, 4294901760
  %v508 = vsub.f32 %v35, %v507
  %v509 = vand.u32 %v508, 4294901760
  %510 = vmatpush1.msra.mxu0 %v509
  %511 = vmatprep.subr.mxu0 0.0
  %v512 = vand.u32 %v36, 4294901760
  %v513 = vsub.f32 %v36, %v512
  %v514 = vand.u32 %v513, 4294901760
  %515 = vmatpush1.msra.mxu0 %v514
  %516 = vmatprep.subr.mxu0 0.0
  %v517 = vand.u32 %v37, 4294901760
  %v518 = vsub.f32 %v37, %v517
  %v519 = vand.u32 %v518, 4294901760
  %520 = vmatpush1.msra.mxu0 %v519
  %521 = vmatprep.subr.mxu0 0.0
  %v522 = vand.u32 %v38, 4294901760
  %v523 = vsub.f32 %v38, %v522
  %v524 = vand.u32 %v523, 4294901760
  %525 = vmatpush1.msra.mxu0 %v524
  %526 = vmatprep.subr.mxu0 0.0
  %v527 = vand.u32 %v39, 4294901760
  %v528 = vsub.f32 %v39, %v527
  %v529 = vand.u32 %v528, 4294901760
  %530 = vmatpush1.msra.mxu0 %v529
  %531 = vmatprep.subr.mxu0 0.0
  %v532 = vand.u32 %v40, 4294901760
  %v533 = vsub.f32 %v40, %v532
  %v534 = vand.u32 %v533, 4294901760
  %535 = vmatpush1.msra.mxu0 %v534
  %536 = vmatprep.subr.mxu0 0.0
  %v537 = vand.u32 %v41, 4294901760
  %v538 = vsub.f32 %v41, %v537
  %v539 = vand.u32 %v538, 4294901760
  %540 = vmatpush1.msra.mxu0 %v539
  %541 = vmatprep.subr.mxu0 0.0
  %v542 = vand.u32 %v42, 4294901760
  %v543 = vsub.f32 %v42, %v542
  %v544 = vand.u32 %v543, 4294901760
  %545 = vmatpush1.msra.mxu0 %v544
  %546 = vmatprep.subr.mxu0 0.0
  %v547 = vand.u32 %v43, 4294901760
  %v548 = vsub.f32 %v43, %v547
  %v549 = vand.u32 %v548, 4294901760
  %550 = vmatpush1.msra.mxu0 %v549
  %551 = vmatprep.subr.mxu0 0.0
  %v552 = vand.u32 %v44, 4294901760
  %v553 = vsub.f32 %v44, %v552
  %v554 = vand.u32 %v553, 4294901760
  %555 = vmatpush1.msra.mxu0 %v554
  %556 = vmatprep.subr.mxu0 0.0
  %v557 = vand.u32 %v45, 4294901760
  %v558 = vsub.f32 %v45, %v557
  %v559 = vand.u32 %v558, 4294901760
  %560 = vmatpush1.msra.mxu0 %v559
  %561 = vmatprep.subr.mxu0 0.0
  %562 = vmatpush1.msra.mxu0 0.0
  %563 = vmatprep.subr.mxu0 0.0
  %564 = vmatpush1.msra.mxu0 0.0
  %565 = vmatprep.subr.mxu0 0.0
  %566 = vmatpush1.msra.mxu0 0.0
  %567 = vmatprep.subr.mxu0 0.0
  %568 = vmatpush1.msra.mxu0 0.0
  %569 = vmatprep.subr.mxu0 0.0
  %570 = vmatpush1.msra.mxu0 0.0
  %571 = vmatprep.subr.mxu0 0.0
  %572 = vmatpush1.msra.mxu0 0.0
  %573 = vmatprep.subr.mxu0 0.0
  %574 = vmatpush1.msra.mxu0 0.0
  %575 = vmatprep.subr.mxu0 0.0
  %576 = vmatpush1.msra.mxu0 0.0
  %577 = vmatprep.subr.mxu0 0.0
  %578 = vmatpush1.msra.mxu0 0.0
  %579 = vmatprep.subr.mxu0 0.0
  %580 = vmatpush1.msra.mxu0 0.0
  %581 = vmatprep.subr.mxu0 0.0
  %582 = vmatpush1.msra.mxu0 0.0
  %583 = vmatprep.subr.mxu0 0.0
  %584 = vmatpush1.msra.mxu0 0.0
  %585 = vmatprep.subr.mxu0 0.0
  %586 = vmatpush1.msra.mxu0 0.0
  %587 = vmatprep.subr.mxu0 0.0
  %588 = vmatpush1.msra.mxu0 0.0
  %589 = vmatprep.subr.mxu0 0.0
  %590 = vmatpush1.msra.mxu0 0.0
  %591 = vmatprep.subr.mxu0 0.0
  %592 = vmatpush1.msra.mxu0 0.0
  %593 = vmatprep.mubr.f32.mxu0 0.0
  %v594 = vand.u32 %v28, 4294901760
  %595 = vmatmul.mubr.f32.gmra.mrb[0].mxu0 %v594
  %v596 = vpop.f32.mrb[0].mxu0
  %v597 = vadd.f32 %v478, %v596
  %v598 = vpop.f32.mrb[0].mxu0
  %599 = vdwg.mxu0
  %600 = vmatprep.subr.mxu0 0.0
  %v601 = vand.u32 %v30, 4294901760
  %602 = vmatpush1.msra.mxu0 %v601
  %603 = vmatprep.subr.mxu0 0.0
  %v604 = vand.u32 %v31, 4294901760
  %605 = vmatpush1.msra.mxu0 %v604
  %606 = vmatprep.subr.mxu0 0.0
  %v607 = vand.u32 %v32, 4294901760
  %608 = vmatpush1.msra.mxu0 %v607
  %609 = vmatprep.subr.mxu0 0.0
  %v610 = vand.u32 %v33, 4294901760
  %611 = vmatpush1.msra.mxu0 %v610
  %612 = vmatprep.subr.mxu0 0.0
  %v613 = vand.u32 %v34, 4294901760
  %614 = vmatpush1.msra.mxu0 %v613
  %615 = vmatprep.subr.mxu0 0.0
  %v616 = vand.u32 %v35, 4294901760
  %617 = vmatpush1.msra.mxu0 %v616
  %618 = vmatprep.subr.mxu0 0.0
  %v619 = vand.u32 %v36, 4294901760
  %620 = vmatpush1.msra.mxu0 %v619
  %621 = vmatprep.subr.mxu0 0.0
  %v622 = vand.u32 %v37, 4294901760
  %623 = vmatpush1.msra.mxu0 %v622
  %624 = vmatprep.subr.mxu0 0.0
  %v625 = vand.u32 %v38, 4294901760
  %626 = vmatpush1.msra.mxu0 %v625
  %627 = vmatprep.subr.mxu0 0.0
  %v628 = vand.u32 %v39, 4294901760
  %629 = vmatpush1.msra.mxu0 %v628
  %630 = vmatprep.subr.mxu0 0.0
  %v631 = vand.u32 %v40, 4294901760
  %632 = vmatpush1.msra.mxu0 %v631
  %633 = vmatprep.subr.mxu0 0.0
  %v634 = vand.u32 %v41, 4294901760
  %635 = vmatpush1.msra.mxu0 %v634
  %636 = vmatprep.subr.mxu0 0.0
  %v637 = vand.u32 %v42, 4294901760
  %638 = vmatpush1.msra.mxu0 %v637
  %639 = vmatprep.subr.mxu0 0.0
  %v640 = vand.u32 %v43, 4294901760
  %641 = vmatpush1.msra.mxu0 %v640
  %642 = vmatprep.subr.mxu0 0.0
  %v643 = vand.u32 %v44, 4294901760
  %644 = vmatpush1.msra.mxu0 %v643
  %645 = vmatprep.subr.mxu0 0.0
  %v646 = vand.u32 %v45, 4294901760
  %647 = vmatpush1.msra.mxu0 %v646
  %648 = vmatprep.subr.mxu0 0.0
  %649 = vmatpush1.msra.mxu0 0.0
  %650 = vmatprep.subr.mxu0 0.0
  %651 = vmatpush1.msra.mxu0 0.0
  %652 = vmatprep.subr.mxu0 0.0
  %653 = vmatpush1.msra.mxu0 0.0
  %654 = vmatprep.subr.mxu0 0.0
  %655 = vmatpush1.msra.mxu0 0.0
  %656 = vmatprep.subr.mxu0 0.0
  %657 = vmatpush1.msra.mxu0 0.0
  %658 = vmatprep.subr.mxu0 0.0
  %659 = vmatpush1.msra.mxu0 0.0
  %660 = vmatprep.subr.mxu0 0.0
  %661 = vmatpush1.msra.mxu0 0.0
  %662 = vmatprep.subr.mxu0 0.0
  %663 = vmatpush1.msra.mxu0 0.0
  %664 = vmatprep.subr.mxu0 0.0
  %665 = vmatpush1.msra.mxu0 0.0
  %666 = vmatprep.subr.mxu0 0.0
  %667 = vmatpush1.msra.mxu0 0.0
  %668 = vmatprep.subr.mxu0 0.0
  %669 = vmatpush1.msra.mxu0 0.0
  %670 = vmatprep.subr.mxu0 0.0
  %671 = vmatpush1.msra.mxu0 0.0
  %672 = vmatprep.subr.mxu0 0.0
  %673 = vmatpush1.msra.mxu0 0.0
  %674 = vmatprep.subr.mxu0 0.0
  %675 = vmatpush1.msra.mxu0 0.0
  %676 = vmatprep.subr.mxu0 0.0
  %677 = vmatpush1.msra.mxu0 0.0
  %678 = vmatprep.subr.mxu0 0.0
  %679 = vmatpush1.msra.mxu0 0.0
  %680 = vmatprep.mubr.f32.mxu0 0.0
  %v681 = vand.u32 %v28, 4294901760
  %682 = vmatmul.mubr.f32.gmra.mrb[0].mxu0 %v681
  %v683 = vpop.f32.mrb[0].mxu0
  %v684 = vadd.f32 %v597, %v683
  %v685 = vpop.f32.mrb[0].mxu0
  %686 = vdwg.mxu0
  %v687 = vadd.f32 %v29, %v684
  %688 = vst [vmem:[#allocation2] sm:$0xff] %v687
  // Predicated region
  $region18: #{update_u.1} parent=0 // pred_check
    %p689 = pneg %p14
  $region19: #{update_u.1} parent=0 // pred_check_branch
    %691 = sbr.rel (%p689) target = $region21
  $region20: #{update_u.1} parent=0 // pred_region
    %v692 = vld [vmem:[#allocation2] sm:$0xff]
    %v693 = vld [vmem:[%s1] sm:$0xff]
    %v694 = vadd.f32 %v692, %v693
    %695 = vst [vmem:[%s3] sm:$0xff] %v694
  $region21: #{update_u.1} parent=0 // pred_fallthru
    _
  // Predicated region
  $region22: #{update_u.1} parent=0 // pred_check
    _
  $region23: #{update_u.1} parent=0 // pred_check_branch
    %697 = sbr.rel (0) target = $region25
  $region24: #{update_u.1} parent=0 // pred_region
    _
  $region25: #{update_u.1} parent=0 // pred_fallthru
    _
  // Predicated region
  $region26: #{update_u.1} parent=0 // pred_check
    _
  $region27: #{update_u.1} parent=0 // pred_check_branch
    %699 = sbr.rel (0) target = $region29
  $region28: #{update_u.1} parent=0 // pred_region
    _
  $region29: #{update_u.1} parent=0 // pred_fallthru
    _

</llo_original>
